<compile_context>
chip_gen: v5e
topology: v5e:2x2
jax: 0.10.0
libtpu: 0.0.40
codegen_flags: <defaults>
</compile_context>

<pallas_src>
import functools

import jax
import jax.numpy as jnp
from jax.experimental import pallas as pl
from jax.experimental.pallas import tpu as pltpu


def _layernorm_kernel(x_ref, w_ref, b_ref, o_ref, *, eps, inv_h):
    # x_ref: (TM, H) tile of rows; w_ref / b_ref: (1, H) resident parameters.
    x = x_ref[...].astype(jnp.float32)
    u = jnp.sum(x, axis=-1, keepdims=True) * inv_h            # mean(-1, keepdim)
    xc = x - u
    s = jnp.sum(xc * xc, axis=-1, keepdims=True) * inv_h      # biased variance
    inv = jax.lax.rsqrt(s + eps)                              # eps inside sqrt (TF style)
    y = xc * inv
    w = w_ref[...].astype(jnp.float32)                        # (1, H) broadcasts over rows
    b = b_ref[...].astype(jnp.float32)
    o_ref[...] = (w * y + b).astype(o_ref.dtype)


def _choose_row_tile(rows, hidden, itemsize):
    """Largest row tile fitting a ~4 MiB per-buffer VMEM budget (input dtype).

    With input + output tiles double-buffered plus the compiler-managed f32
    intermediates this stays comfortably under the 32 MiB scoped VMEM limit
    on all of v5e / v6e / v7x, and sits in the measured 85%+ HBM-roofline
    plateau (512-1024 row tiles).
    """
    budget_bytes = 4 * 1024 * 1024
    cand = budget_bytes // max(hidden * itemsize, 1)
    cand = max(min(cand, 1024), 16)
    cand = (cand // 16) * 16       # multiple of 16: bf16 (16,128) sublane packing safe
    if rows <= cand:
        return rows                # single block == full array dim (always legal)
    return cand


def bert_layer_norm(x, weight, bias, eps=1e-12, row_tile=None):
    """x: (..., hidden). weight/bias: (hidden,). Returns same shape/dtype as x."""
    orig_shape = x.shape
    hidden = orig_shape[-1]
    rows = 1
    for d in orig_shape[:-1]:
        rows *= d
    x2 = x.reshape(rows, hidden)

    if row_tile is None:
        row_tile = _choose_row_tile(rows, hidden, x2.dtype.itemsize)

    w2 = weight.reshape(1, hidden)
    b2 = bias.reshape(1, hidden)

    # Ragged last block (rows % row_tile != 0): Pallas masks the partial
    # store, and the per-row reduction over hidden never mixes rows, so
    # valid outputs are unaffected.
    grid = (pl.cdiv(rows, row_tile),)

    kernel = functools.partial(
        _layernorm_kernel, eps=float(eps), inv_h=1.0 / float(hidden))

    out = pl.pallas_call(
        kernel,
        out_shape=jax.ShapeDtypeStruct((rows, hidden), x.dtype),
        grid_spec=pltpu.PrefetchScalarGridSpec(
            num_scalar_prefetch=0,
            grid=grid,
            in_specs=[
                pl.BlockSpec((row_tile, hidden), lambda i: (i, 0)),
                pl.BlockSpec((1, hidden), lambda i: (0, 0)),   # weight: resident
                pl.BlockSpec((1, hidden), lambda i: (0, 0)),   # bias: resident
            ],
            out_specs=pl.BlockSpec((row_tile, hidden), lambda i: (i, 0)),
        ),
        compiler_params=pltpu.CompilerParams(
            dimension_semantics=("parallel",),   # shard rows across v7x's 2 TCs
            vmem_limit_bytes=32 * 1024 * 1024,
        ),
    )(x2, w2, b2)

    return out.reshape(orig_shape)


def _ref_layernorm(x, weight, bias, eps):
    u = jnp.mean(x, axis=-1, keepdims=True)
    s = jnp.mean((x - u) ** 2, axis=-1, keepdims=True)
    return weight * ((x - u) / jnp.sqrt(s + eps)) + bias


if __name__ == "__main__":
    key = jax.random.PRNGKey(0)

    # --- Small demo shape consistent with the module (batch, seq, hidden) ---
    batch, seq, hidden = 2, 8, 32
    x = jax.random.normal(key, (batch, seq, hidden), dtype=jnp.float32)

    # nn.Parameter(torch.ones/zeros(hidden)) initialization
    weight = jnp.ones((hidden,), dtype=jnp.float32)
    bias = jnp.zeros((hidden,), dtype=jnp.float32)

    y = bert_layer_norm(x, weight, bias, eps=1e-12)
    y = jax.block_until_ready(y)

    ref = _ref_layernorm(x, weight, bias, 1e-12)
    assert jnp.allclose(y, ref, atol=1e-5, rtol=1e-5), "mismatch vs reference"

    # --- Exercise the ragged-last-block path (rows % row_tile != 0) ---
    k2 = jax.random.PRNGKey(0)
    x2 = jax.random.normal(k2, (3, 7, 128), dtype=jnp.float32)   # rows = 21
    w2 = jnp.ones((128,), dtype=jnp.float32)
    b2 = jnp.zeros((128,), dtype=jnp.float32)
    y2 = bert_layer_norm(x2, w2, b2, eps=1e-12, row_tile=16)     # grid=2, ragged tail
    y2 = jax.block_until_ready(y2)
    ref2 = _ref_layernorm(x2, w2, b2, 1e-12)
    assert jnp.allclose(y2, ref2, atol=1e-5, rtol=1e-5), "ragged-block mismatch"

    # --- bf16 path (packed sublanes, f32 accumulation inside the kernel) ---
    x3 = jax.random.normal(jax.random.PRNGKey(0), (4, 16, 256), dtype=jnp.bfloat16)
    w3 = jnp.ones((256,), dtype=jnp.bfloat16)
    b3 = jnp.zeros((256,), dtype=jnp.bfloat16)
    y3 = jax.block_until_ready(bert_layer_norm(x3, w3, b3, eps=1e-12))
    ref3 = _ref_layernorm(x3.astype(jnp.float32), w3.astype(jnp.float32),
                          b3.astype(jnp.float32), 1e-12)
    assert jnp.allclose(y3.astype(jnp.float32), ref3, atol=2e-2, rtol=2e-2), \
        "bf16 mismatch"

    print("KERNEL_OK")
</pallas_src>

<mosaic_0001>
module attributes {stable_mosaic.version = 11 : i64} {
  func.func @_layernorm_kernel(%arg0: i32, %arg1: memref<16x32xf32, #tpu.memory_space<vmem>>, %arg2: memref<1x32xf32, #tpu.memory_space<vmem>>, %arg3: memref<1x32xf32, #tpu.memory_space<vmem>>, %arg4: memref<16x32xf32, #tpu.memory_space<vmem>>) attributes {dimension_semantics = [#tpu.dimension_semantics<parallel>], iteration_bounds = array<i64: 1>, scalar_prefetch = 0 : i64, scratch_operands = 0 : i64, tpu.core_type = #tpu.core_type<tc>, window_params = [{transform_indices = @transform_0, window_bounds = array<i64: 16, 32>}, {pipeline_mode = #tpu.pipeline_mode<synchronous>, transform_indices = @transform_1, window_bounds = array<i64: 1, 32>}, {pipeline_mode = #tpu.pipeline_mode<synchronous>, transform_indices = @transform_2, window_bounds = array<i64: 1, 32>}, {transform_indices = @transform_3, window_bounds = array<i64: 16, 32>}]} {
    %c0 = arith.constant 0 : index
    %c0_0 = arith.constant 0 : index
    %0 = vector.load %arg1[%c0, %c0_0] : memref<16x32xf32, #tpu.memory_space<vmem>>, vector<16x32xf32>
    %cst = arith.constant dense<0.000000e+00> : vector<16xf32>
    %1 = vector.multi_reduction <add>, %0, %cst [1] : vector<16x32xf32> to vector<16xf32>
    %2 = vector.shape_cast %1 : vector<16xf32> to vector<16x1xf32>
    %cst_1 = arith.constant 3.125000e-02 : f32
    %3 = vector.broadcast %cst_1 : f32 to vector<16x1xf32>
    %4 = arith.mulf %2, %3 : vector<16x1xf32>
    %5 = vector.broadcast %4 : vector<16x1xf32> to vector<16x32xf32>
    %6 = arith.subf %0, %5 : vector<16x32xf32>
    %7 = arith.mulf %6, %6 : vector<16x32xf32>
    %cst_2 = arith.constant dense<0.000000e+00> : vector<16xf32>
    %8 = vector.multi_reduction <add>, %7, %cst_2 [1] : vector<16x32xf32> to vector<16xf32>
    %9 = vector.shape_cast %8 : vector<16xf32> to vector<16x1xf32>
    %cst_3 = arith.constant 3.125000e-02 : f32
    %10 = vector.broadcast %cst_3 : f32 to vector<16x1xf32>
    %11 = arith.mulf %9, %10 : vector<16x1xf32>
    %cst_4 = arith.constant 9.99999996E-13 : f32
    %12 = vector.broadcast %cst_4 : f32 to vector<16x1xf32>
    %13 = arith.addf %11, %12 : vector<16x1xf32>
    %14 = math.rsqrt %13 : vector<16x1xf32>
    %15 = vector.broadcast %14 : vector<16x1xf32> to vector<16x32xf32>
    %16 = arith.mulf %6, %15 : vector<16x32xf32>
    %c0_5 = arith.constant 0 : index
    %c0_6 = arith.constant 0 : index
    %17 = vector.load %arg2[%c0_5, %c0_6] : memref<1x32xf32, #tpu.memory_space<vmem>>, vector<1x32xf32>
    %c0_7 = arith.constant 0 : index
    %c0_8 = arith.constant 0 : index
    %18 = vector.load %arg3[%c0_7, %c0_8] : memref<1x32xf32, #tpu.memory_space<vmem>>, vector<1x32xf32>
    %19 = vector.broadcast %17 : vector<1x32xf32> to vector<16x32xf32>
    %20 = arith.mulf %19, %16 : vector<16x32xf32>
    %21 = vector.broadcast %18 : vector<1x32xf32> to vector<16x32xf32>
    %22 = arith.addf %20, %21 : vector<16x32xf32>
    %c0_9 = arith.constant 0 : index
    %c0_10 = arith.constant 0 : index
    %23 = vector.load %arg4[%c0_9, %c0_10] : memref<16x32xf32, #tpu.memory_space<vmem>>, vector<16x32xf32>
    tpu.vector_store %arg4[%c0_9, %c0_10], %22 {strides = array<i32>} : memref<16x32xf32, #tpu.memory_space<vmem>>, vector<16x32xf32>,
    return
  }
  func.func @transform_0(%arg0: i32) -> (i32, i32) {
    %c0_i32 = arith.constant 0 : i32
    %c0_i32_0 = arith.constant 0 : i32
    return %arg0, %c0_i32 : i32, i32
  }
  func.func @transform_1(%arg0: i32) -> (i32, i32) {
    %c0_i32 = arith.constant 0 : i32
    %c0_i32_0 = arith.constant 0 : i32
    %c0_i32_1 = arith.constant 0 : i32
    return %c0_i32, %c0_i32_0 : i32, i32
  }
  func.func @transform_2(%arg0: i32) -> (i32, i32) {
    %c0_i32 = arith.constant 0 : i32
    %c0_i32_0 = arith.constant 0 : i32
    %c0_i32_1 = arith.constant 0 : i32
    return %c0_i32, %c0_i32_0 : i32, i32
  }
  func.func @transform_3(%arg0: i32) -> (i32, i32) {
    %c0_i32 = arith.constant 0 : i32
    %c0_i32_0 = arith.constant 0 : i32
    return %arg0, %c0_i32 : i32, i32
  }
}

</mosaic_0001>

<llo_original>
// kernel: tpu_custom_call.1
$region0: #{tpu_custom_call.1}
  #allocation0 [shape = 'u32[]', space=smem, size = 0x4, offset = 0x4, fixed_abs, tag = 'smem constant byte address 0x4 - core index']
  #allocation1 [shape = 'u32[72,128]{1,0:T(1,128)}', space=vmem, size = 0x9000, scoped, tag = 'internal scratch']
  %s0 = inlined_call_operand.hbm [shape: f32[16,32], index: 0, kind: input, shape index: {}]
  %s1 = inlined_call_operand.hbm [shape: f32[1,32], index: 1, kind: input, shape index: {}]
  %s2 = inlined_call_operand.vmem [shape: f32[1,32], index: 2, kind: input, shape index: {}]
  %s3 = inlined_call_operand.hbm [shape: f32[16,32], index: 3, kind: output, shape index: {}]
  %s4 = sld [smem:[#allocation0]]
  $region30: #{tpu_custom_call.1} parent=0
    _
  %s6 = ssub.s32 1, %s4
  %s7 = scalar_select 0, %s6, %s4
  $region1: #{tpu_custom_call.1} parent=0
    #allocation2 [shape = 'u8[8192]{0}', space=vmem, size = 0x2000, scoped, tag = 'input window, operand 0, single buffered']
    #allocation3 [shape = 's32[1]{0}', space=sflag, size = 0x4, scoped, tag = 'scoped memory for tpu_custom_call.1']
    #allocation4 [shape = 's32[1]{0}', space=sflag, size = 0x4, scoped, tag = 'scoped memory for tpu_custom_call.1']
    #allocation5 [shape = 'u8[512]{0}', space=vmem, size = 0x400, scoped, tag = 'input window, operand 1, single buffered']
    #allocation6 [shape = 's32[1]{0}', space=sflag, size = 0x4, scoped, tag = 'scoped memory for tpu_custom_call.1']
    #allocation7 [shape = 'u8[8192]{0}', space=vmem, size = 0x2000, scoped, tag = 'output window, operand 0, single buffered']
    %8 = vsyncpa [#allocation3], 0
    %9 = vsyncpa [#allocation6], 0
    %10 = vsyncpa [#allocation4], 0
    // Predicated region
    $region2: #{tpu_custom_call.1} parent=1 // pred_check
      _
    $region3: #{tpu_custom_call.1} parent=1 // pred_check_branch
      %12 = sbr.rel (0) target = $region5
    $region4: #{tpu_custom_call.1} parent=1 // pred_region
      %14 = vsyncadd [#allocation3], 0
      %s15 = sshll.u32 %s0, 4
      %s16 = int_to_ptr.hbm [resolvable:$true] %s15
      %s17 = sshll.u32 [#allocation2], 4
      %s18 = int_to_ptr.vmem [resolvable:$true] %s17
      %23 = dma.hbm_to_vmem [thread:$0]  %s16, 256, %s18, [#allocation3], 128, 128, 8
    $region5: #{tpu_custom_call.1} parent=1 // pred_fallthru
      _
    // Predicated region
    $region6: #{tpu_custom_call.1} parent=1 // pred_check
      _
    $region7: #{tpu_custom_call.1} parent=1 // pred_check_branch
      %25 = sbr.rel (0) target = $region9
    $region8: #{tpu_custom_call.1} parent=1 // pred_region
      %27 = vsyncadd [#allocation6], 0
      %s29 = sshll.u32 %s1, 4
      %s30 = int_to_ptr.hbm [resolvable:$true] %s29
      %s31 = sshll.u32 [#allocation5], 4
      %s32 = int_to_ptr.vmem [resolvable:$true] %s31
      %34 = dma.hbm_to_vmem [thread:$0]  %s30, 16, %s32, [#allocation6]
    $region9: #{tpu_custom_call.1} parent=1 // pred_fallthru
      _
    // Predicated region
    $region10: #{tpu_custom_call.1} parent=1 // pred_check
      _
    $region11: #{tpu_custom_call.1} parent=1 // pred_check_branch
      %36 = sbr.rel (0) target = $region13
    $region12: #{tpu_custom_call.1} parent=1 // pred_region
      _
    $region13: #{tpu_custom_call.1} parent=1 // pred_fallthru
      _
    // Predicated region
    $region14: #{tpu_custom_call.1} parent=1 // pred_check
      _
    $region15: #{tpu_custom_call.1} parent=1 // pred_check_branch
      %38 = sbr.rel (0) target = $region17
    $region16: #{tpu_custom_call.1} parent=1 // pred_region
      %40 = dma.done [#allocation3], 256
    $region17: #{tpu_custom_call.1} parent=1 // pred_fallthru
      _
    // Predicated region
    $region18: #{tpu_custom_call.1} parent=1 // pred_check
      _
    $region19: #{tpu_custom_call.1} parent=1 // pred_check_branch
      %42 = sbr.rel (0) target = $region21
    $region20: #{tpu_custom_call.1} parent=1 // pred_region
      %44 = dma.done [#allocation6], 16
    $region21: #{tpu_custom_call.1} parent=1 // pred_fallthru
      _
    %v45 = vld [vmem:[#allocation2] sm:$0xff]
    %v46 = vld [vmem:[#allocation2 + $0x8] sm:$0xff]
    %vm47 = vcmask 261120
    %v48 = vsel %vm47, %v45, 0.0
    %49 = vadd.xlane.f32.xlu0 %v48
    %v50 = vpop.xlane.xlu0 %49
    %v51 = vsel %vm47, %v46, 0.0
    %52 = vadd.xlane.f32.xlu0 %v51
    %v53 = vpop.xlane.xlu0 %52
    %v54 = vmul.f32 %v50, 0.03125
    %v55 = vmul.f32 %v53, 0.03125
    %v56 = vsub.f32 %v45, %v54
    %v57 = vsub.f32 %v46, %v55
    %v58 = vmul.f32 %v56, %v56
    %v59 = vmul.f32 %v57, %v57
    %v60 = vsel %vm47, %v58, 0.0
    %61 = vadd.xlane.f32.xlu0 %v60
    %v62 = vpop.xlane.xlu0 %61
    %v63 = vsel %vm47, %v59, 0.0
    %64 = vadd.xlane.f32.xlu0 %v63
    %v65 = vpop.xlane.xlu0 %64
    %v66 = vmul.f32 %v62, 0.03125
    %v67 = vmul.f32 %v65, 0.03125
    %v68 = vadd.f32 %v66, 1e-12
    %v69 = vadd.f32 %v67, 1e-12
    %v70 = vrsqrt.pop %v68
    %v71 = vmul.f32 %v70, %v68
    %v72 = vmul.f32 %v71, %v70
    %v73 = vmul.f32 0.5, %v72
    %v74 = vsub.f32 1.5, %v73
    %v75 = vmul.f32 %v70, %v74
    %vm76 = vweird.f32 %v68
    %vm77 = vweird.f32 %v70
    %vm78 = vmor %vm76, %vm77
    %v79 = vsel %vm78, %v70, %v75
    %v80 = vrsqrt.pop %v69
    %v81 = vmul.f32 %v80, %v69
    %v82 = vmul.f32 %v81, %v80
    %v83 = vmul.f32 0.5, %v82
    %v84 = vsub.f32 1.5, %v83
    %v85 = vmul.f32 %v80, %v84
    %vm86 = vweird.f32 %v69
    %vm87 = vweird.f32 %v80
    %vm88 = vmor %vm86, %vm87
    %v89 = vsel %vm88, %v80, %v85
    %v90 = vmul.f32 %v56, %v79
    %v91 = vmul.f32 %v57, %v89
    %v92 = vld [vmem:[#allocation5] sm:$0x1]
    %v93 = vld [vmem:[%s2] sm:$0x1]
    %v95 = vperm.slane %v92, 0
    %v97 = vmul.f32 %v95, %v90
    %v98 = vmul.f32 %v95, %v91
    %v100 = vperm.slane %v93, 0
    %v102 = vadd.f32 %v97, %v100
    %v103 = vadd.f32 %v98, %v100
    %104 = vst.msk [vmem:[#allocation7] sm:$0xff] %vm47, %v102
    %105 = vst.msk [vmem:[#allocation7 + $0x8] sm:$0xff] %vm47, %v103
    // Predicated region
    $region22: #{tpu_custom_call.1} parent=1 // pred_check
      _
    $region23: #{tpu_custom_call.1} parent=1 // pred_check_branch
      %107 = sbr.rel (0) target = $region25
    $region24: #{tpu_custom_call.1} parent=1 // pred_region
      %109 = vsyncadd [#allocation4], 0
      %s110 = sshll.u32 [#allocation7], 4
      %s111 = int_to_ptr.vmem [resolvable:$true] %s110
      %s112 = sshll.u32 %s3, 4
      %s113 = int_to_ptr.hbm [resolvable:$true] %s112
      %118 = dma.vmem_to_hbm [thread:$0]  %s111, 256, %s113, [#allocation4], 128, 128, 8
    $region25: #{tpu_custom_call.1} parent=1 // pred_fallthru
      _
    // Predicated region
    $region26: #{tpu_custom_call.1} parent=1 // pred_check
      _
    $region27: #{tpu_custom_call.1} parent=1 // pred_check_branch
      %120 = sbr.rel (0) target = $region29
    $region28: #{tpu_custom_call.1} parent=1 // pred_region
      %122 = dma.done [#allocation4], 256
    $region29: #{tpu_custom_call.1} parent=1 // pred_fallthru
      _
    %123 = vsyncpa [#allocation3], 1
    %124 = vsyncpa [#allocation6], 1
    %125 = vsyncpa [#allocation4], 1

</llo_original>
